<compile_context>
chip_gen: v5e
topology: v5e:2x2
jax: 0.10.0
libtpu: 0.0.40
codegen_flags: <defaults>
</compile_context>

<pallas_src>
import functools

import jax
import jax.numpy as jnp
from jax.experimental import pallas as pl
from jax.experimental.pallas import tpu as pltpu


def _basic_conv_kernel(x_ref, w_ref, bias_ref, out_ref, *,
                       taps, out_len, apply_relu, use_mxu):
    """One batch element per grid step.

    x_ref:    (C_in, S_flat)        flattened zero-padded input
    w_ref:    (KH*KW, C_out, C_in)  per-tap weights (BN scale pre-folded)
    bias_ref: (C_out, 1)            folded BatchNorm/conv bias
    out_ref:  (C_out, out_len)      out_len = H_out * W_pad (junk cols cropped outside)
    """
    c_out = out_ref.shape[0]
    c_in = x_ref.shape[0]
    acc = jnp.zeros((c_out, out_len), jnp.float32)
    for t, off in enumerate(taps):                     # static unrolled tap loop
        x_slice = x_ref[:, off:off + out_len]          # (C_in, out_len), contiguous
        w_tap = w_ref[t]                               # (C_out, C_in)
        if use_mxu:
            acc = acc + jnp.dot(w_tap, x_slice,
                                preferred_element_type=jnp.float32)
        else:
            # Tiny contraction: stay on the VPU (broadcast FMA), skip the MXU
            # round-trip entirely.
            for c in range(c_in):
                acc = acc + w_tap[:, c:c + 1] * x_slice[c:c + 1, :]
    y = acc + bias_ref[...]
    if apply_relu:
        y = jnp.maximum(y, 0.0)
    out_ref[...] = y.astype(out_ref.dtype)


def basic_conv(x, weight, *, stride=1, padding=0, dilation=1, groups=1,
               conv_bias=None, bn_params=None, relu=True):
    """Forward of BasicConv: Conv2d (bias optional) -> BatchNorm2d (eval) -> ReLU.

    x:      (B, C_in, H, W) float32, NCHW (PyTorch layout)
    weight: (C_out, C_in, KH, KW)       (PyTorch OIHW layout)
    bn_params: None or (gamma, beta, running_mean, running_var, eps)
    """
    # TODO(synk): stride > 1 and grouped convolutions are not implemented here
    # (CBAM's BasicConv uses stride=1, groups=1).
    assert stride == 1 and groups == 1, "only stride=1, groups=1 supported"

    B, C_in, H, W = x.shape
    C_out, C_in_w, KH, KW = weight.shape
    assert C_in_w == C_in

    H_pad, W_pad = H + 2 * padding, W + 2 * padding
    H_out = H_pad - dilation * (KH - 1)
    W_out = W_pad - dilation * (KW - 1)
    assert H_out > 0 and W_out > 0

    S_pad = H_pad * W_pad
    out_len = H_out * W_pad                 # lane-dense output rows (junk cols at the end)
    extra = (KW - 1) * dilation             # tail so the last tap slice stays in bounds
    S_flat = S_pad + extra

    x_p = jnp.pad(x.astype(jnp.float32),
                  ((0, 0), (0, 0), (padding, padding), (padding, padding)))
    x_flat = x_p.reshape(B, C_in, S_pad)
    if extra:
        x_flat = jnp.pad(x_flat, ((0, 0), (0, 0), (0, extra)))

    taps = tuple(kh * dilation * W_pad + kw * dilation
                 for kh in range(KH) for kw in range(KW))

    # Fold conv bias + inference-mode BatchNorm into the weights / a per-channel
    # bias:  y = scale*(W*x + b_conv) + shift  ==  (scale*W)*x + (shift + scale*b_conv)
    if bn_params is not None:
        gamma, beta, mean, var, eps = bn_params
        scale_c = gamma / jnp.sqrt(var + eps)
        bias_c = beta - mean * scale_c
    else:
        scale_c = jnp.ones((C_out,), jnp.float32)
        bias_c = jnp.zeros((C_out,), jnp.float32)
    if conv_bias is not None:
        bias_c = bias_c + scale_c * conv_bias

    w_scaled = weight.astype(jnp.float32) * scale_c[:, None, None, None]
    w_taps = jnp.transpose(w_scaled, (2, 3, 0, 1)).reshape(KH * KW, C_out, C_in)
    bias = bias_c.reshape(C_out, 1).astype(jnp.float32)

    use_mxu = C_in >= 16                    # tiny contractions stay on the VPU
    kernel = functools.partial(_basic_conv_kernel, taps=taps, out_len=out_len,
                               apply_relu=relu, use_mxu=use_mxu)

    flops = 2 * B * C_out * C_in * KH * KW * out_len
    bytes_accessed = 4 * (B * C_in * S_flat + B * C_out * out_len
                          + w_taps.size + C_out)

    out = pl.pallas_call(
        kernel,
        out_shape=jax.ShapeDtypeStruct((B, C_out, out_len), jnp.float32),
        grid=(B,),
        in_specs=[
            pl.BlockSpec((None, C_in, S_flat), lambda b: (b, 0, 0)),
            pl.BlockSpec((KH * KW, C_out, C_in), lambda b: (0, 0, 0)),
            pl.BlockSpec((C_out, 1), lambda b: (0, 0)),
        ],
        out_specs=pl.BlockSpec((None, C_out, out_len), lambda b: (b, 0, 0)),
        compiler_params=pltpu.CompilerParams(
            dimension_semantics=("parallel",),   # batch elems independent -> 2 TCs on v7x
            vmem_limit_bytes=64 * 1024 * 1024,
        ),
        cost_estimate=pl.CostEstimate(flops=int(flops), transcendentals=0,
                                      bytes_accessed=int(bytes_accessed)),
    )(x_flat, w_taps, bias)

    # Drop the per-row wrap-around junk columns of the flat-stencil result.
    out = out.reshape(B, C_out, H_out, W_pad)[:, :, :, :W_out]
    return out


def basic_conv_ref(x, weight, *, stride=1, padding=0, dilation=1, groups=1,
                   conv_bias=None, bn_params=None, relu=True):
    """Pure-JAX reference of BasicConv.forward (BN in inference mode)."""
    out = jax.lax.conv_general_dilated(
        x, weight,
        window_strides=(stride, stride),
        padding=((padding, padding), (padding, padding)),
        rhs_dilation=(dilation, dilation),
        dimension_numbers=("NCHW", "OIHW", "NCHW"),
        feature_group_count=groups,
        precision=jax.lax.Precision.HIGHEST)
    if conv_bias is not None:
        out = out + conv_bias[None, :, None, None]
    if bn_params is not None:
        gamma, beta, mean, var, eps = bn_params
        out = (out - mean[None, :, None, None]) / jnp.sqrt(
            var[None, :, None, None] + eps)
        out = out * gamma[None, :, None, None] + beta[None, :, None, None]
    if relu:
        out = jnp.maximum(out, 0.0)
    return out


def init_params(key, c_in, c_out, k):
    """Conv weight (torch default-ish uniform) + non-trivial BN running stats."""
    kw_, kg, kb, km, kv = jax.random.split(key, 5)
    fan_in = c_in * k * k
    bound = 1.0 / jnp.sqrt(fan_in)
    weight = jax.random.uniform(kw_, (c_out, c_in, k, k), jnp.float32, -bound, bound)
    gamma = jax.random.uniform(kg, (c_out,), jnp.float32, 0.5, 1.5)
    beta = 0.1 * jax.random.normal(kb, (c_out,), jnp.float32)
    mean = 0.1 * jax.random.normal(km, (c_out,), jnp.float32)
    var = jax.random.uniform(kv, (c_out,), jnp.float32, 0.5, 1.5)
    return weight, (gamma, beta, mean, var, 1e-5)


if __name__ == "__main__":
    key = jax.random.PRNGKey(0)

    # Test 1: module defaults (bn=True, relu=True, bias=False), small channels
    # -> VPU contraction path.  x: (2, 4, 16, 16), 3x3 conv, padding=1.
    B, C_in, C_out, H, W, K = 2, 4, 8, 16, 16, 3
    k1, k2, key = jax.random.split(key, 3)
    x = jax.random.normal(k1, (B, C_in, H, W), dtype=jnp.float32)
    weight, bn_params = init_params(k2, C_in, C_out, K)

    out = basic_conv(x, weight, padding=1, bn_params=bn_params, relu=True)
    out = jax.block_until_ready(out)
    ref = basic_conv_ref(x, weight, padding=1, bn_params=bn_params, relu=True)
    assert out.shape == (B, C_out, H, W)
    assert jnp.allclose(out, ref, atol=1e-4, rtol=1e-4), "VPU-path mismatch vs reference"

    # Test 2: larger channel count -> MXU contraction path; relu=False branch.
    C_in2, C_out2 = 32, 32
    k3, k4, key = jax.random.split(key, 3)
    x2 = jax.random.normal(k3, (B, C_in2, H, W), dtype=jnp.float32)
    weight2, bn_params2 = init_params(k4, C_in2, C_out2, K)

    out2 = basic_conv(x2, weight2, padding=1, bn_params=bn_params2, relu=False)
    out2 = jax.block_until_ready(out2)
    ref2 = basic_conv_ref(x2, weight2, padding=1, bn_params=bn_params2, relu=False)
    assert out2.shape == (B, C_out2, H, W)
    assert jnp.allclose(out2, ref2, atol=1e-2, rtol=1e-2), "MXU-path mismatch vs reference"

    print("KERNEL_OK")
</pallas_src>

<mosaic_0001>
module attributes {stable_mosaic.version = 11 : i64} {
  func.func @_basic_conv_kernel(%arg0: i32, %arg1: memref<1x4x326xf32, #tpu.memory_space<vmem>>, %arg2: memref<9x8x4xf32, #tpu.memory_space<vmem>>, %arg3: memref<8x1xf32, #tpu.memory_space<vmem>>, %arg4: memref<1x8x288xf32, #tpu.memory_space<vmem>>) attributes {dimension_semantics = [#tpu.dimension_semantics<parallel>], iteration_bounds = array<i64: 2>, scalar_prefetch = 0 : i64, scratch_operands = 0 : i64, tpu.core_type = #tpu.core_type<tc>, window_params = [{transform_indices = @transform_0, window_bounds = array<i64: 1, 4, 326>}, {pipeline_mode = #tpu.pipeline_mode<synchronous>, transform_indices = @transform_1, window_bounds = array<i64: 9, 8, 4>}, {pipeline_mode = #tpu.pipeline_mode<synchronous>, transform_indices = @transform_2, window_bounds = array<i64: 8, 1>}, {transform_indices = @transform_3, window_bounds = array<i64: 1, 8, 288>}]} {
    %cst = arith.constant 0.000000e+00 : f32
    %0 = vector.broadcast %cst : f32 to vector<8x288xf32>
    %c0 = arith.constant 0 : index
    %c0_0 = arith.constant 0 : index
    %c0_1 = arith.constant 0 : index
    %1 = vector.load %arg1[%c0, %c0_0, %c0_1] : memref<1x4x326xf32, #tpu.memory_space<vmem>>, vector<1x4x288xf32>
    %2 = vector.shape_cast %1 : vector<1x4x288xf32> to vector<4x288xf32>
    %c0_2 = arith.constant 0 : index
    %c0_3 = arith.constant 0 : index
    %c0_4 = arith.constant 0 : index
    %3 = vector.load %arg2[%c0_2, %c0_3, %c0_4] : memref<9x8x4xf32, #tpu.memory_space<vmem>>, vector<1x8x4xf32>
    %4 = vector.shape_cast %3 : vector<1x8x4xf32> to vector<8x4xf32>
    %5 = vector.extract_strided_slice %4 {offsets = [0, 0], sizes = [8, 1], strides = [1, 1]} : vector<8x4xf32> to vector<8x1xf32>
    %6 = vector.extract_strided_slice %2 {offsets = [0, 0], sizes = [1, 288], strides = [1, 1]} : vector<4x288xf32> to vector<1x288xf32>
    %7 = vector.broadcast %5 : vector<8x1xf32> to vector<8x288xf32>
    %8 = vector.broadcast %6 : vector<1x288xf32> to vector<8x288xf32>
    %9 = arith.mulf %7, %8 : vector<8x288xf32>
    %10 = arith.addf %0, %9 : vector<8x288xf32>
    %11 = vector.extract_strided_slice %4 {offsets = [0, 1], sizes = [8, 1], strides = [1, 1]} : vector<8x4xf32> to vector<8x1xf32>
    %12 = vector.extract_strided_slice %2 {offsets = [1, 0], sizes = [1, 288], strides = [1, 1]} : vector<4x288xf32> to vector<1x288xf32>
    %13 = vector.broadcast %11 : vector<8x1xf32> to vector<8x288xf32>
    %14 = vector.broadcast %12 : vector<1x288xf32> to vector<8x288xf32>
    %15 = arith.mulf %13, %14 : vector<8x288xf32>
    %16 = arith.addf %10, %15 : vector<8x288xf32>
    %17 = vector.extract_strided_slice %4 {offsets = [0, 2], sizes = [8, 1], strides = [1, 1]} : vector<8x4xf32> to vector<8x1xf32>
    %18 = vector.extract_strided_slice %2 {offsets = [2, 0], sizes = [1, 288], strides = [1, 1]} : vector<4x288xf32> to vector<1x288xf32>
    %19 = vector.broadcast %17 : vector<8x1xf32> to vector<8x288xf32>
    %20 = vector.broadcast %18 : vector<1x288xf32> to vector<8x288xf32>
    %21 = arith.mulf %19, %20 : vector<8x288xf32>
    %22 = arith.addf %16, %21 : vector<8x288xf32>
    %23 = vector.extract_strided_slice %4 {offsets = [0, 3], sizes = [8, 1], strides = [1, 1]} : vector<8x4xf32> to vector<8x1xf32>
    %24 = vector.extract_strided_slice %2 {offsets = [3, 0], sizes = [1, 288], strides = [1, 1]} : vector<4x288xf32> to vector<1x288xf32>
    %25 = vector.broadcast %23 : vector<8x1xf32> to vector<8x288xf32>
    %26 = vector.broadcast %24 : vector<1x288xf32> to vector<8x288xf32>
    %27 = arith.mulf %25, %26 : vector<8x288xf32>
    %28 = arith.addf %22, %27 : vector<8x288xf32>
    %c0_5 = arith.constant 0 : index
    %c0_6 = arith.constant 0 : index
    %c1 = arith.constant 1 : index
    %29 = vector.load %arg1[%c0_5, %c0_6, %c1] : memref<1x4x326xf32, #tpu.memory_space<vmem>>, vector<1x4x288xf32>
    %30 = vector.shape_cast %29 : vector<1x4x288xf32> to vector<4x288xf32>
    %c1_7 = arith.constant 1 : index
    %c0_8 = arith.constant 0 : index
    %c0_9 = arith.constant 0 : index
    %31 = vector.load %arg2[%c1_7, %c0_8, %c0_9] : memref<9x8x4xf32, #tpu.memory_space<vmem>>, vector<1x8x4xf32>
    %32 = vector.shape_cast %31 : vector<1x8x4xf32> to vector<8x4xf32>
    %33 = vector.extract_strided_slice %32 {offsets = [0, 0], sizes = [8, 1], strides = [1, 1]} : vector<8x4xf32> to vector<8x1xf32>
    %34 = vector.extract_strided_slice %30 {offsets = [0, 0], sizes = [1, 288], strides = [1, 1]} : vector<4x288xf32> to vector<1x288xf32>
    %35 = vector.broadcast %33 : vector<8x1xf32> to vector<8x288xf32>
    %36 = vector.broadcast %34 : vector<1x288xf32> to vector<8x288xf32>
    %37 = arith.mulf %35, %36 : vector<8x288xf32>
    %38 = arith.addf %28, %37 : vector<8x288xf32>
    %39 = vector.extract_strided_slice %32 {offsets = [0, 1], sizes = [8, 1], strides = [1, 1]} : vector<8x4xf32> to vector<8x1xf32>
    %40 = vector.extract_strided_slice %30 {offsets = [1, 0], sizes = [1, 288], strides = [1, 1]} : vector<4x288xf32> to vector<1x288xf32>
    %41 = vector.broadcast %39 : vector<8x1xf32> to vector<8x288xf32>
    %42 = vector.broadcast %40 : vector<1x288xf32> to vector<8x288xf32>
    %43 = arith.mulf %41, %42 : vector<8x288xf32>
    %44 = arith.addf %38, %43 : vector<8x288xf32>
    %45 = vector.extract_strided_slice %32 {offsets = [0, 2], sizes = [8, 1], strides = [1, 1]} : vector<8x4xf32> to vector<8x1xf32>
    %46 = vector.extract_strided_slice %30 {offsets = [2, 0], sizes = [1, 288], strides = [1, 1]} : vector<4x288xf32> to vector<1x288xf32>
    %47 = vector.broadcast %45 : vector<8x1xf32> to vector<8x288xf32>
    %48 = vector.broadcast %46 : vector<1x288xf32> to vector<8x288xf32>
    %49 = arith.mulf %47, %48 : vector<8x288xf32>
    %50 = arith.addf %44, %49 : vector<8x288xf32>
    %51 = vector.extract_strided_slice %32 {offsets = [0, 3], sizes = [8, 1], strides = [1, 1]} : vector<8x4xf32> to vector<8x1xf32>
    %52 = vector.extract_strided_slice %30 {offsets = [3, 0], sizes = [1, 288], strides = [1, 1]} : vector<4x288xf32> to vector<1x288xf32>
    %53 = vector.broadcast %51 : vector<8x1xf32> to vector<8x288xf32>
    %54 = vector.broadcast %52 : vector<1x288xf32> to vector<8x288xf32>
    %55 = arith.mulf %53, %54 : vector<8x288xf32>
    %56 = arith.addf %50, %55 : vector<8x288xf32>
    %c0_10 = arith.constant 0 : index
    %c0_11 = arith.constant 0 : index
    %c2 = arith.constant 2 : index
    %57 = vector.load %arg1[%c0_10, %c0_11, %c2] : memref<1x4x326xf32, #tpu.memory_space<vmem>>, vector<1x4x288xf32>
    %58 = vector.shape_cast %57 : vector<1x4x288xf32> to vector<4x288xf32>
    %c2_12 = arith.constant 2 : index
    %c0_13 = arith.constant 0 : index
    %c0_14 = arith.constant 0 : index
    %59 = vector.load %arg2[%c2_12, %c0_13, %c0_14] : memref<9x8x4xf32, #tpu.memory_space<vmem>>, vector<1x8x4xf32>
    %60 = vector.shape_cast %59 : vector<1x8x4xf32> to vector<8x4xf32>
    %61 = vector.extract_strided_slice %60 {offsets = [0, 0], sizes = [8, 1], strides = [1, 1]} : vector<8x4xf32> to vector<8x1xf32>
    %62 = vector.extract_strided_slice %58 {offsets = [0, 0], sizes = [1, 288], strides = [1, 1]} : vector<4x288xf32> to vector<1x288xf32>
    %63 = vector.broadcast %61 : vector<8x1xf32> to vector<8x288xf32>
    %64 = vector.broadcast %62 : vector<1x288xf32> to vector<8x288xf32>
    %65 = arith.mulf %63, %64 : vector<8x288xf32>
    %66 = arith.addf %56, %65 : vector<8x288xf32>
    %67 = vector.extract_strided_slice %60 {offsets = [0, 1], sizes = [8, 1], strides = [1, 1]} : vector<8x4xf32> to vector<8x1xf32>
    %68 = vector.extract_strided_slice %58 {offsets = [1, 0], sizes = [1, 288], strides = [1, 1]} : vector<4x288xf32> to vector<1x288xf32>
    %69 = vector.broadcast %67 : vector<8x1xf32> to vector<8x288xf32>
    %70 = vector.broadcast %68 : vector<1x288xf32> to vector<8x288xf32>
    %71 = arith.mulf %69, %70 : vector<8x288xf32>
    %72 = arith.addf %66, %71 : vector<8x288xf32>
    %73 = vector.extract_strided_slice %60 {offsets = [0, 2], sizes = [8, 1], strides = [1, 1]} : vector<8x4xf32> to vector<8x1xf32>
    %74 = vector.extract_strided_slice %58 {offsets = [2, 0], sizes = [1, 288], strides = [1, 1]} : vector<4x288xf32> to vector<1x288xf32>
    %75 = vector.broadcast %73 : vector<8x1xf32> to vector<8x288xf32>
    %76 = vector.broadcast %74 : vector<1x288xf32> to vector<8x288xf32>
    %77 = arith.mulf %75, %76 : vector<8x288xf32>
    %78 = arith.addf %72, %77 : vector<8x288xf32>
    %79 = vector.extract_strided_slice %60 {offsets = [0, 3], sizes = [8, 1], strides = [1, 1]} : vector<8x4xf32> to vector<8x1xf32>
    %80 = vector.extract_strided_slice %58 {offsets = [3, 0], sizes = [1, 288], strides = [1, 1]} : vector<4x288xf32> to vector<1x288xf32>
    %81 = vector.broadcast %79 : vector<8x1xf32> to vector<8x288xf32>
    %82 = vector.broadcast %80 : vector<1x288xf32> to vector<8x288xf32>
    %83 = arith.mulf %81, %82 : vector<8x288xf32>
    %84 = arith.addf %78, %83 : vector<8x288xf32>
    %c0_15 = arith.constant 0 : index
    %c0_16 = arith.constant 0 : index
    %c18 = arith.constant 18 : index
    %85 = vector.load %arg1[%c0_15, %c0_16, %c18] : memref<1x4x326xf32, #tpu.memory_space<vmem>>, vector<1x4x288xf32>
    %86 = vector.shape_cast %85 : vector<1x4x288xf32> to vector<4x288xf32>
    %c3 = arith.constant 3 : index
    %c0_17 = arith.constant 0 : index
    %c0_18 = arith.constant 0 : index
    %87 = vector.load %arg2[%c3, %c0_17, %c0_18] : memref<9x8x4xf32, #tpu.memory_space<vmem>>, vector<1x8x4xf32>
    %88 = vector.shape_cast %87 : vector<1x8x4xf32> to vector<8x4xf32>
    %89 = vector.extract_strided_slice %88 {offsets = [0, 0], sizes = [8, 1], strides = [1, 1]} : vector<8x4xf32> to vector<8x1xf32>
    %90 = vector.extract_strided_slice %86 {offsets = [0, 0], sizes = [1, 288], strides = [1, 1]} : vector<4x288xf32> to vector<1x288xf32>
    %91 = vector.broadcast %89 : vector<8x1xf32> to vector<8x288xf32>
    %92 = vector.broadcast %90 : vector<1x288xf32> to vector<8x288xf32>
    %93 = arith.mulf %91, %92 : vector<8x288xf32>
    %94 = arith.addf %84, %93 : vector<8x288xf32>
    %95 = vector.extract_strided_slice %88 {offsets = [0, 1], sizes = [8, 1], strides = [1, 1]} : vector<8x4xf32> to vector<8x1xf32>
    %96 = vector.extract_strided_slice %86 {offsets = [1, 0], sizes = [1, 288], strides = [1, 1]} : vector<4x288xf32> to vector<1x288xf32>
    %97 = vector.broadcast %95 : vector<8x1xf32> to vector<8x288xf32>
    %98 = vector.broadcast %96 : vector<1x288xf32> to vector<8x288xf32>
    %99 = arith.mulf %97, %98 : vector<8x288xf32>
    %100 = arith.addf %94, %99 : vector<8x288xf32>
    %101 = vector.extract_strided_slice %88 {offsets = [0, 2], sizes = [8, 1], strides = [1, 1]} : vector<8x4xf32> to vector<8x1xf32>
    %102 = vector.extract_strided_slice %86 {offsets = [2, 0], sizes = [1, 288], strides = [1, 1]} : vector<4x288xf32> to vector<1x288xf32>
    %103 = vector.broadcast %101 : vector<8x1xf32> to vector<8x288xf32>
    %104 = vector.broadcast %102 : vector<1x288xf32> to vector<8x288xf32>
    %105 = arith.mulf %103, %104 : vector<8x288xf32>
    %106 = arith.addf %100, %105 : vector<8x288xf32>
    %107 = vector.extract_strided_slice %88 {offsets = [0, 3], sizes = [8, 1], strides = [1, 1]} : vector<8x4xf32> to vector<8x1xf32>
    %108 = vector.extract_strided_slice %86 {offsets = [3, 0], sizes = [1, 288], strides = [1, 1]} : vector<4x288xf32> to vector<1x288xf32>
    %109 = vector.broadcast %107 : vector<8x1xf32> to vector<8x288xf32>
    %110 = vector.broadcast %108 : vector<1x288xf32> to vector<8x288xf32>
    %111 = arith.mulf %109, %110 : vector<8x288xf32>
    %112 = arith.addf %106, %111 : vector<8x288xf32>
    %c0_19 = arith.constant 0 : index
    %c0_20 = arith.constant 0 : index
    %c19 = arith.constant 19 : index
    %113 = vector.load %arg1[%c0_19, %c0_20, %c19] : memref<1x4x326xf32, #tpu.memory_space<vmem>>, vector<1x4x288xf32>
    %114 = vector.shape_cast %113 : vector<1x4x288xf32> to vector<4x288xf32>
    %c4 = arith.constant 4 : index
    %c0_21 = arith.constant 0 : index
    %c0_22 = arith.constant 0 : index
    %115 = vector.load %arg2[%c4, %c0_21, %c0_22] : memref<9x8x4xf32, #tpu.memory_space<vmem>>, vector<1x8x4xf32>
    %116 = vector.shape_cast %115 : vector<1x8x4xf32> to vector<8x4xf32>
    %117 = vector.extract_strided_slice %116 {offsets = [0, 0], sizes = [8, 1], strides = [1, 1]} : vector<8x4xf32> to vector<8x1xf32>
    %118 = vector.extract_strided_slice %114 {offsets = [0, 0], sizes = [1, 288], strides = [1, 1]} : vector<4x288xf32> to vector<1x288xf32>
    %119 = vector.broadcast %117 : vector<8x1xf32> to vector<8x288xf32>
    %120 = vector.broadcast %118 : vector<1x288xf32> to vector<8x288xf32>
    %121 = arith.mulf %119, %120 : vector<8x288xf32>
    %122 = arith.addf %112, %121 : vector<8x288xf32>
    %123 = vector.extract_strided_slice %116 {offsets = [0, 1], sizes = [8, 1], strides = [1, 1]} : vector<8x4xf32> to vector<8x1xf32>
    %124 = vector.extract_strided_slice %114 {offsets = [1, 0], sizes = [1, 288], strides = [1, 1]} : vector<4x288xf32> to vector<1x288xf32>
    %125 = vector.broadcast %123 : vector<8x1xf32> to vector<8x288xf32>
    %126 = vector.broadcast %124 : vector<1x288xf32> to vector<8x288xf32>
    %127 = arith.mulf %125, %126 : vector<8x288xf32>
    %128 = arith.addf %122, %127 : vector<8x288xf32>
    %129 = vector.extract_strided_slice %116 {offsets = [0, 2], sizes = [8, 1], strides = [1, 1]} : vector<8x4xf32> to vector<8x1xf32>
    %130 = vector.extract_strided_slice %114 {offsets = [2, 0], sizes = [1, 288], strides = [1, 1]} : vector<4x288xf32> to vector<1x288xf32>
    %131 = vector.broadcast %129 : vector<8x1xf32> to vector<8x288xf32>
    %132 = vector.broadcast %130 : vector<1x288xf32> to vector<8x288xf32>
    %133 = arith.mulf %131, %132 : vector<8x288xf32>
    %134 = arith.addf %128, %133 : vector<8x288xf32>
    %135 = vector.extract_strided_slice %116 {offsets = [0, 3], sizes = [8, 1], strides = [1, 1]} : vector<8x4xf32> to vector<8x1xf32>
    %136 = vector.extract_strided_slice %114 {offsets = [3, 0], sizes = [1, 288], strides = [1, 1]} : vector<4x288xf32> to vector<1x288xf32>
    %137 = vector.broadcast %135 : vector<8x1xf32> to vector<8x288xf32>
    %138 = vector.broadcast %136 : vector<1x288xf32> to vector<8x288xf32>
    %139 = arith.mulf %137, %138 : vector<8x288xf32>
    %140 = arith.addf %134, %139 : vector<8x288xf32>
    %c0_23 = arith.constant 0 : index
    %c0_24 = arith.constant 0 : index
    %c20 = arith.constant 20 : index
    %141 = vector.load %arg1[%c0_23, %c0_24, %c20] : memref<1x4x326xf32, #tpu.memory_space<vmem>>, vector<1x4x288xf32>
    %142 = vector.shape_cast %141 : vector<1x4x288xf32> to vector<4x288xf32>
    %c5 = arith.constant 5 : index
    %c0_25 = arith.constant 0 : index
    %c0_26 = arith.constant 0 : index
    %143 = vector.load %arg2[%c5, %c0_25, %c0_26] : memref<9x8x4xf32, #tpu.memory_space<vmem>>, vector<1x8x4xf32>
    %144 = vector.shape_cast %143 : vector<1x8x4xf32> to vector<8x4xf32>
    %145 = vector.extract_strided_slice %144 {offsets = [0, 0], sizes = [8, 1], strides = [1, 1]} : vector<8x4xf32> to vector<8x1xf32>
    %146 = vector.extract_strided_slice %142 {offsets = [0, 0], sizes = [1, 288], strides = [1, 1]} : vector<4x288xf32> to vector<1x288xf32>
    %147 = vector.broadcast %145 : vector<8x1xf32> to vector<8x288xf32>
    %148 = vector.broadcast %146 : vector<1x288xf32> to vector<8x288xf32>
    %149 = arith.mulf %147, %148 : vector<8x288xf32>
    %150 = arith.addf %140, %149 : vector<8x288xf32>
    %151 = vector.extract_strided_slice %144 {offsets = [0, 1], sizes = [8, 1], strides = [1, 1]} : vector<8x4xf32> to vector<8x1xf32>
    %152 = vector.extract_strided_slice %142 {offsets = [1, 0], sizes = [1, 288], strides = [1, 1]} : vector<4x288xf32> to vector<1x288xf32>
    %153 = vector.broadcast %151 : vector<8x1xf32> to vector<8x288xf32>
    %154 = vector.broadcast %152 : vector<1x288xf32> to vector<8x288xf32>
    %155 = arith.mulf %153, %154 : vector<8x288xf32>
    %156 = arith.addf %150, %155 : vector<8x288xf32>
    %157 = vector.extract_strided_slice %144 {offsets = [0, 2], sizes = [8, 1], strides = [1, 1]} : vector<8x4xf32> to vector<8x1xf32>
    %158 = vector.extract_strided_slice %142 {offsets = [2, 0], sizes = [1, 288], strides = [1, 1]} : vector<4x288xf32> to vector<1x288xf32>
    %159 = vector.broadcast %157 : vector<8x1xf32> to vector<8x288xf32>
    %160 = vector.broadcast %158 : vector<1x288xf32> to vector<8x288xf32>
    %161 = arith.mulf %159, %160 : vector<8x288xf32>
    %162 = arith.addf %156, %161 : vector<8x288xf32>
    %163 = vector.extract_strided_slice %144 {offsets = [0, 3], sizes = [8, 1], strides = [1, 1]} : vector<8x4xf32> to vector<8x1xf32>
    %164 = vector.extract_strided_slice %142 {offsets = [3, 0], sizes = [1, 288], strides = [1, 1]} : vector<4x288xf32> to vector<1x288xf32>
    %165 = vector.broadcast %163 : vector<8x1xf32> to vector<8x288xf32>
    %166 = vector.broadcast %164 : vector<1x288xf32> to vector<8x288xf32>
    %167 = arith.mulf %165, %166 : vector<8x288xf32>
    %168 = arith.addf %162, %167 : vector<8x288xf32>
    %c0_27 = arith.constant 0 : index
    %c0_28 = arith.constant 0 : index
    %c36 = arith.constant 36 : index
    %169 = vector.load %arg1[%c0_27, %c0_28, %c36] : memref<1x4x326xf32, #tpu.memory_space<vmem>>, vector<1x4x288xf32>
    %170 = vector.shape_cast %169 : vector<1x4x288xf32> to vector<4x288xf32>
    %c6 = arith.constant 6 : index
    %c0_29 = arith.constant 0 : index
    %c0_30 = arith.constant 0 : index
    %171 = vector.load %arg2[%c6, %c0_29, %c0_30] : memref<9x8x4xf32, #tpu.memory_space<vmem>>, vector<1x8x4xf32>
    %172 = vector.shape_cast %171 : vector<1x8x4xf32> to vector<8x4xf32>
    %173 = vector.extract_strided_slice %172 {offsets = [0, 0], sizes = [8, 1], strides = [1, 1]} : vector<8x4xf32> to vector<8x1xf32>
    %174 = vector.extract_strided_slice %170 {offsets = [0, 0], sizes = [1, 288], strides = [1, 1]} : vector<4x288xf32> to vector<1x288xf32>
    %175 = vector.broadcast %173 : vector<8x1xf32> to vector<8x288xf32>
    %176 = vector.broadcast %174 : vector<1x288xf32> to vector<8x288xf32>
    %177 = arith.mulf %175, %176 : vector<8x288xf32>
    %178 = arith.addf %168, %177 : vector<8x288xf32>
    %179 = vector.extract_strided_slice %172 {offsets = [0, 1], sizes = [8, 1], strides = [1, 1]} : vector<8x4xf32> to vector<8x1xf32>
    %180 = vector.extract_strided_slice %170 {offsets = [1, 0], sizes = [1, 288], strides = [1, 1]} : vector<4x288xf32> to vector<1x288xf32>
    %181 = vector.broadcast %179 : vector<8x1xf32> to vector<8x288xf32>
    %182 = vector.broadcast %180 : vector<1x288xf32> to vector<8x288xf32>
    %183 = arith.mulf %181, %182 : vector<8x288xf32>
    %184 = arith.addf %178, %183 : vector<8x288xf32>
    %185 = vector.extract_strided_slice %172 {offsets = [0, 2], sizes = [8, 1], strides = [1, 1]} : vector<8x4xf32> to vector<8x1xf32>
    %186 = vector.extract_strided_slice %170 {offsets = [2, 0], sizes = [1, 288], strides = [1, 1]} : vector<4x288xf32> to vector<1x288xf32>
    %187 = vector.broadcast %185 : vector<8x1xf32> to vector<8x288xf32>
    %188 = vector.broadcast %186 : vector<1x288xf32> to vector<8x288xf32>
    %189 = arith.mulf %187, %188 : vector<8x288xf32>
    %190 = arith.addf %184, %189 : vector<8x288xf32>
    %191 = vector.extract_strided_slice %172 {offsets = [0, 3], sizes = [8, 1], strides = [1, 1]} : vector<8x4xf32> to vector<8x1xf32>
    %192 = vector.extract_strided_slice %170 {offsets = [3, 0], sizes = [1, 288], strides = [1, 1]} : vector<4x288xf32> to vector<1x288xf32>
    %193 = vector.broadcast %191 : vector<8x1xf32> to vector<8x288xf32>
    %194 = vector.broadcast %192 : vector<1x288xf32> to vector<8x288xf32>
    %195 = arith.mulf %193, %194 : vector<8x288xf32>
    %196 = arith.addf %190, %195 : vector<8x288xf32>
    %c0_31 = arith.constant 0 : index
    %c0_32 = arith.constant 0 : index
    %c37 = arith.constant 37 : index
    %197 = vector.load %arg1[%c0_31, %c0_32, %c37] : memref<1x4x326xf32, #tpu.memory_space<vmem>>, vector<1x4x288xf32>
    %198 = vector.shape_cast %197 : vector<1x4x288xf32> to vector<4x288xf32>
    %c7 = arith.constant 7 : index
    %c0_33 = arith.constant 0 : index
    %c0_34 = arith.constant 0 : index
    %199 = vector.load %arg2[%c7, %c0_33, %c0_34] : memref<9x8x4xf32, #tpu.memory_space<vmem>>, vector<1x8x4xf32>
    %200 = vector.shape_cast %199 : vector<1x8x4xf32> to vector<8x4xf32>
    %201 = vector.extract_strided_slice %200 {offsets = [0, 0], sizes = [8, 1], strides = [1, 1]} : vector<8x4xf32> to vector<8x1xf32>
    %202 = vector.extract_strided_slice %198 {offsets = [0, 0], sizes = [1, 288], strides = [1, 1]} : vector<4x288xf32> to vector<1x288xf32>
    %203 = vector.broadcast %201 : vector<8x1xf32> to vector<8x288xf32>
    %204 = vector.broadcast %202 : vector<1x288xf32> to vector<8x288xf32>
    %205 = arith.mulf %203, %204 : vector<8x288xf32>
    %206 = arith.addf %196, %205 : vector<8x288xf32>
    %207 = vector.extract_strided_slice %200 {offsets = [0, 1], sizes = [8, 1], strides = [1, 1]} : vector<8x4xf32> to vector<8x1xf32>
    %208 = vector.extract_strided_slice %198 {offsets = [1, 0], sizes = [1, 288], strides = [1, 1]} : vector<4x288xf32> to vector<1x288xf32>
    %209 = vector.broadcast %207 : vector<8x1xf32> to vector<8x288xf32>
    %210 = vector.broadcast %208 : vector<1x288xf32> to vector<8x288xf32>
    %211 = arith.mulf %209, %210 : vector<8x288xf32>
    %212 = arith.addf %206, %211 : vector<8x288xf32>
    %213 = vector.extract_strided_slice %200 {offsets = [0, 2], sizes = [8, 1], strides = [1, 1]} : vector<8x4xf32> to vector<8x1xf32>
    %214 = vector.extract_strided_slice %198 {offsets = [2, 0], sizes = [1, 288], strides = [1, 1]} : vector<4x288xf32> to vector<1x288xf32>
    %215 = vector.broadcast %213 : vector<8x1xf32> to vector<8x288xf32>
    %216 = vector.broadcast %214 : vector<1x288xf32> to vector<8x288xf32>
    %217 = arith.mulf %215, %216 : vector<8x288xf32>
    %218 = arith.addf %212, %217 : vector<8x288xf32>
    %219 = vector.extract_strided_slice %200 {offsets = [0, 3], sizes = [8, 1], strides = [1, 1]} : vector<8x4xf32> to vector<8x1xf32>
    %220 = vector.extract_strided_slice %198 {offsets = [3, 0], sizes = [1, 288], strides = [1, 1]} : vector<4x288xf32> to vector<1x288xf32>
    %221 = vector.broadcast %219 : vector<8x1xf32> to vector<8x288xf32>
    %222 = vector.broadcast %220 : vector<1x288xf32> to vector<8x288xf32>
    %223 = arith.mulf %221, %222 : vector<8x288xf32>
    %224 = arith.addf %218, %223 : vector<8x288xf32>
    %c0_35 = arith.constant 0 : index
    %c0_36 = arith.constant 0 : index
    %c38 = arith.constant 38 : index
    %225 = vector.load %arg1[%c0_35, %c0_36, %c38] : memref<1x4x326xf32, #tpu.memory_space<vmem>>, vector<1x4x288xf32>
    %226 = vector.shape_cast %225 : vector<1x4x288xf32> to vector<4x288xf32>
    %c8 = arith.constant 8 : index
    %c0_37 = arith.constant 0 : index
    %c0_38 = arith.constant 0 : index
    %227 = vector.load %arg2[%c8, %c0_37, %c0_38] : memref<9x8x4xf32, #tpu.memory_space<vmem>>, vector<1x8x4xf32>
    %228 = vector.shape_cast %227 : vector<1x8x4xf32> to vector<8x4xf32>
    %229 = vector.extract_strided_slice %228 {offsets = [0, 0], sizes = [8, 1], strides = [1, 1]} : vector<8x4xf32> to vector<8x1xf32>
    %230 = vector.extract_strided_slice %226 {offsets = [0, 0], sizes = [1, 288], strides = [1, 1]} : vector<4x288xf32> to vector<1x288xf32>
    %231 = vector.broadcast %229 : vector<8x1xf32> to vector<8x288xf32>
    %232 = vector.broadcast %230 : vector<1x288xf32> to vector<8x288xf32>
    %233 = arith.mulf %231, %232 : vector<8x288xf32>
    %234 = arith.addf %224, %233 : vector<8x288xf32>
    %235 = vector.extract_strided_slice %228 {offsets = [0, 1], sizes = [8, 1], strides = [1, 1]} : vector<8x4xf32> to vector<8x1xf32>
    %236 = vector.extract_strided_slice %226 {offsets = [1, 0], sizes = [1, 288], strides = [1, 1]} : vector<4x288xf32> to vector<1x288xf32>
    %237 = vector.broadcast %235 : vector<8x1xf32> to vector<8x288xf32>
    %238 = vector.broadcast %236 : vector<1x288xf32> to vector<8x288xf32>
    %239 = arith.mulf %237, %238 : vector<8x288xf32>
    %240 = arith.addf %234, %239 : vector<8x288xf32>
    %241 = vector.extract_strided_slice %228 {offsets = [0, 2], sizes = [8, 1], strides = [1, 1]} : vector<8x4xf32> to vector<8x1xf32>
    %242 = vector.extract_strided_slice %226 {offsets = [2, 0], sizes = [1, 288], strides = [1, 1]} : vector<4x288xf32> to vector<1x288xf32>
    %243 = vector.broadcast %241 : vector<8x1xf32> to vector<8x288xf32>
    %244 = vector.broadcast %242 : vector<1x288xf32> to vector<8x288xf32>
    %245 = arith.mulf %243, %244 : vector<8x288xf32>
    %246 = arith.addf %240, %245 : vector<8x288xf32>
    %247 = vector.extract_strided_slice %228 {offsets = [0, 3], sizes = [8, 1], strides = [1, 1]} : vector<8x4xf32> to vector<8x1xf32>
    %248 = vector.extract_strided_slice %226 {offsets = [3, 0], sizes = [1, 288], strides = [1, 1]} : vector<4x288xf32> to vector<1x288xf32>
    %249 = vector.broadcast %247 : vector<8x1xf32> to vector<8x288xf32>
    %250 = vector.broadcast %248 : vector<1x288xf32> to vector<8x288xf32>
    %251 = arith.mulf %249, %250 : vector<8x288xf32>
    %252 = arith.addf %246, %251 : vector<8x288xf32>
    %c0_39 = arith.constant 0 : index
    %c0_40 = arith.constant 0 : index
    %253 = vector.load %arg3[%c0_39, %c0_40] : memref<8x1xf32, #tpu.memory_space<vmem>>, vector<8x1xf32>
    %254 = vector.broadcast %253 : vector<8x1xf32> to vector<8x288xf32>
    %255 = arith.addf %252, %254 : vector<8x288xf32>
    %cst_41 = arith.constant 0.000000e+00 : f32
    %256 = vector.broadcast %cst_41 : f32 to vector<8x288xf32>
    %257 = arith.maximumf %255, %256 : vector<8x288xf32>
    %c0_42 = arith.constant 0 : index
    %c0_43 = arith.constant 0 : index
    %c0_44 = arith.constant 0 : index
    %258 = vector.load %arg4[%c0_42, %c0_43, %c0_44] : memref<1x8x288xf32, #tpu.memory_space<vmem>>, vector<1x8x288xf32>
    %259 = vector.shape_cast %258 : vector<1x8x288xf32> to vector<8x288xf32>
    %260 = vector.shape_cast %257 : vector<8x288xf32> to vector<1x8x288xf32>
    tpu.vector_store %arg4[%c0_42, %c0_43, %c0_44], %260 {strides = array<i32>} : memref<1x8x288xf32, #tpu.memory_space<vmem>>, vector<1x8x288xf32>,
    return
  }
  func.func @transform_0(%arg0: i32) -> (i32, i32, i32) {
    %c0_i32 = arith.constant 0 : i32
    %c0_i32_0 = arith.constant 0 : i32
    %c0_i32_1 = arith.constant 0 : i32
    return %arg0, %c0_i32, %c0_i32_0 : i32, i32, i32
  }
  func.func @transform_1(%arg0: i32) -> (i32, i32, i32) {
    %c0_i32 = arith.constant 0 : i32
    %c0_i32_0 = arith.constant 0 : i32
    %c0_i32_1 = arith.constant 0 : i32
    %c0_i32_2 = arith.constant 0 : i32
    return %c0_i32, %c0_i32_0, %c0_i32_1 : i32, i32, i32
  }
  func.func @transform_2(%arg0: i32) -> (i32, i32) {
    %c0_i32 = arith.constant 0 : i32
    %c0_i32_0 = arith.constant 0 : i32
    %c0_i32_1 = arith.constant 0 : i32
    return %c0_i32, %c0_i32_0 : i32, i32
  }
  func.func @transform_3(%arg0: i32) -> (i32, i32, i32) {
    %c0_i32 = arith.constant 0 : i32
    %c0_i32_0 = arith.constant 0 : i32
    %c0_i32_1 = arith.constant 0 : i32
    return %arg0, %c0_i32, %c0_i32_0 : i32, i32, i32
  }
}

</mosaic_0001>

<llo_original>
// kernel: tpu_custom_call.1
$region0: #{tpu_custom_call.1}
  #allocation0 [shape = 'u32[]', space=smem, size = 0x4, offset = 0x4, fixed_abs, tag = 'smem constant byte address 0x4 - core index']
  #allocation1 [shape = 'u32[72,128]{1,0:T(1,128)}', space=vmem, size = 0x9000, scoped, tag = 'internal scratch']
  %s0 = inlined_call_operand.vmem [shape: f32[2,4,326], index: 0, kind: input, shape index: {}]
  %s1 = inlined_call_operand.vmem [shape: f32[9,8,4], index: 1, kind: input, shape index: {}]
  %s2 = inlined_call_operand.vmem [shape: f32[8,1], index: 2, kind: input, shape index: {}]
  %s3 = inlined_call_operand.hbm [shape: f32[2,8,288], index: 3, kind: output, shape index: {}]
  %s4 = sld [smem:[#allocation0]]
  $region45: #{tpu_custom_call.1} parent=0
    _
  %s6 = ssub.s32 1, %s4
  %s7 = scalar_select 0, %s6, %s4
  $region1: #{tpu_custom_call.1} parent=0
    #allocation2 [shape = 'u8[24576]{0}', space=vmem, size = 0x6000, scoped, tag = 'output window, operand 0']
    #allocation3 [shape = 's32[2]{0}', space=sflag, size = 0x8, scoped, tag = 'scoped memory for tpu_custom_call.1']
    %8 = vsyncpa [#allocation3], 0
    %s9 = scalar_lea.sflag [#allocation3], 1
    %10 = vsyncpa %s9, 0
    loop: start=0, step=1, limit=4
    $region2: #{tpu_custom_call.1} parent=1 // loop_pre_header
      _
    $region3: #{tpu_custom_call.1} parent=1 // loop_header
      %s12 = sphi 0, %s16
      %p13 = scmp.ge.s32.totalorder %s12, 4
      %s22 = sphi 0, %s24
      %s25 = sphi 0, %s22
      %s26 = sphi 0, %s25
      %s42 = sphi 0, %s26
      %s46 = sphi 0, %s46
      %s48 = sphi 0, %s46
      %s49 = sphi 0, %s48
      %s63 = sphi 0, %s49
      %s67 = sphi 0, %s67
      %s69 = sphi 0, %s67
      %s70 = sphi 0, %s69
      %s84 = sphi 0, %s70
      %s90 = sphi 0, %s92
      %s93 = sphi 0, %s90
      %s94 = sphi 0, %s93
      %s110 = sphi 0, %s94
    $region4: #{tpu_custom_call.1} parent=1 // loop_header_branch
      %15 = sbr.rel (%p13) target = $region8
    $region5: #{tpu_custom_call.1} parent=1 // loop_body
      %s17 = ssub.s32 %s12, 1
      %s18 = ssub.s32 %s12, 2
      %s19 = sadd.s32 %s12, 1
      %s20 = ssub.s32 %s12, %s19
      %p21 = scmp.eq.s32.totalorder %s20, 0
      %s23 = sadd.s32 %s22, 1
      %s24 = scalar_select %p21, %s22, %s23
      %p27 = pneg %p21
      %p28 = scmp.eq.s32.totalorder %s12, 1
      %p29 = por %p27, %p28
      %p30 = scmp.ne.s32.totalorder %s22, %s25
      %p31 = scmp.eq.s32.totalorder %s12, 0
      %p32 = por %p30, %p31
      %p33 = scmp.ne.s32.totalorder %s22, %s25
      %p34 = scmp.eq.s32.totalorder %s17, 1
      %p35 = por %p33, %p34
      %p36 = scmp.ne.s32.totalorder %s25, %s26
      %p37 = scmp.eq.s32.totalorder %s17, 0
      %p38 = por %p36, %p37
      %p39 = scmp.ne.s32.totalorder %s25, %s26
      %p40 = scmp.eq.s32.totalorder %s18, 1
      %p41 = por %p39, %p40
      %p43 = scmp.ne.s32.totalorder %s26, %s42
      %p44 = scmp.eq.s32.totalorder %s18, 0
      %p45 = por %p43, %p44
      %s47 = sadd.s32 %s46, 1
      %p50 = scmp.eq.s32.totalorder %s12, 1
      %p51 = scmp.ne.s32.totalorder %s46, %s48
      %p52 = scmp.eq.s32.totalorder %s12, 0
      %p53 = por %p51, %p52
      %p54 = scmp.ne.s32.totalorder %s46, %s48
      %p55 = scmp.eq.s32.totalorder %s17, 1
      %p56 = por %p54, %p55
      %p57 = scmp.ne.s32.totalorder %s48, %s49
      %p58 = scmp.eq.s32.totalorder %s17, 0
      %p59 = por %p57, %p58
      %p60 = scmp.ne.s32.totalorder %s48, %s49
      %p61 = scmp.eq.s32.totalorder %s18, 1
      %p62 = por %p60, %p61
      %p64 = scmp.ne.s32.totalorder %s49, %s63
      %p65 = scmp.eq.s32.totalorder %s18, 0
      %p66 = por %p64, %p65
      %s68 = sadd.s32 %s67, 1
      %p71 = scmp.eq.s32.totalorder %s12, 1
      %p72 = scmp.ne.s32.totalorder %s67, %s69
      %p73 = scmp.eq.s32.totalorder %s12, 0
      %p74 = por %p72, %p73
      %p75 = scmp.ne.s32.totalorder %s67, %s69
      %p76 = scmp.eq.s32.totalorder %s17, 1
      %p77 = por %p75, %p76
      %p78 = scmp.ne.s32.totalorder %s69, %s70
      %p79 = scmp.eq.s32.totalorder %s17, 0
      %p80 = por %p78, %p79
      %p81 = scmp.ne.s32.totalorder %s69, %s70
      %p82 = scmp.eq.s32.totalorder %s18, 1
      %p83 = por %p81, %p82
      %p85 = scmp.ne.s32.totalorder %s70, %s84
      %p86 = scmp.eq.s32.totalorder %s18, 0
      %p87 = por %p85, %p86
      %s88 = ssub.s32 %s12, %s19
      %p89 = scmp.eq.s32.totalorder %s88, 0
      %s91 = sadd.s32 %s90, 1
      %s92 = scalar_select %p89, %s90, %s91
      %p95 = pneg %p89
      %p96 = scmp.eq.s32.totalorder %s12, 1
      %p97 = por %p95, %p96
      %p98 = scmp.ne.s32.totalorder %s90, %s93
      %p99 = scmp.eq.s32.totalorder %s12, 0
      %p100 = por %p98, %p99
      %p101 = scmp.ne.s32.totalorder %s90, %s93
      %p102 = scmp.eq.s32.totalorder %s17, 1
      %p103 = por %p101, %p102
      %p104 = scmp.ne.s32.totalorder %s93, %s94
      %p105 = scmp.eq.s32.totalorder %s17, 0
      %p106 = por %p104, %p105
      %p107 = scmp.ne.s32.totalorder %s93, %s94
      %p108 = scmp.eq.s32.totalorder %s18, 1
      %p109 = por %p107, %p108
      %p111 = scmp.ne.s32.totalorder %s94, %s110
      %p112 = scmp.eq.s32.totalorder %s18, 0
      %p113 = por %p111, %p112
      %p114 = scmp.le.s32.totalorder 1, %s12
      %p115 = scmp.lt.s32.totalorder %s12, 3
      %p116 = pnand %p114, %p115
      %p117 = pneg %p116
      // Predicated region
      $region9: #{tpu_custom_call.1} parent=5 // pred_check
        _
      $region10: #{tpu_custom_call.1} parent=5 // pred_check_branch
        %119 = sbr.rel (%p116) target = $region12
      $region11: #{tpu_custom_call.1} parent=5 // pred_region
        %s120 = ssub.s32 %s12, 1
        // Predicated region
        $region13: #{tpu_custom_call.1} parent=11 // pred_check
          %p121 = pneg %p59
        $region14: #{tpu_custom_call.1} parent=11 // pred_check_branch
          %123 = sbr.rel (%p121) target = $region16
        $region15: #{tpu_custom_call.1} parent=11 // pred_region
          _
        $region16: #{tpu_custom_call.1} parent=11 // pred_fallthru
          _
        // Predicated region
        $region17: #{tpu_custom_call.1} parent=11 // pred_check
          %p124 = pneg %p80
        $region18: #{tpu_custom_call.1} parent=11 // pred_check_branch
          %126 = sbr.rel (%p124) target = $region20
        $region19: #{tpu_custom_call.1} parent=11 // pred_region
          _
        $region20: #{tpu_custom_call.1} parent=11 // pred_fallthru
          _
      $region12: #{tpu_custom_call.1} parent=5 // pred_fallthru
        _
      %p127 = scmp.lt.s32.totalorder %s12, 2
      // Predicated region
      $region21: #{tpu_custom_call.1} parent=5 // pred_check
        %p128 = pneg %p127
      $region22: #{tpu_custom_call.1} parent=5 // pred_check_branch
        %130 = sbr.rel (%p128) target = $region24
      $region23: #{tpu_custom_call.1} parent=5 // pred_region
        // Predicated region
        $region25: #{tpu_custom_call.1} parent=23 // pred_check
          %p131 = pneg %p32
        $region26: #{tpu_custom_call.1} parent=23 // pred_check_branch
          %133 = sbr.rel (%p131) target = $region28
        $region27: #{tpu_custom_call.1} parent=23 // pred_region
          %p134 = scmp.lt.s32.totalorder %s12, 1
          %s135 = scalar_select %p134, %s12, 1
          %s136 = smul.addr %s135, 3
          %s137 = smul.addr %s136, 4
          %s138 = scalar_lea.vmem %s0, %s137
        $region28: #{tpu_custom_call.1} parent=23 // pred_fallthru
          _
      $region24: #{tpu_custom_call.1} parent=5 // pred_fallthru
        _
      %p139 = scmp.le.s32.totalorder 1, %s12
      %p140 = scmp.lt.s32.totalorder %s12, 3
      %p141 = pnand %p139, %p140
      %p142 = pneg %p141
      // Predicated region
      $region29: #{tpu_custom_call.1} parent=5 // pred_check
        _
      $region30: #{tpu_custom_call.1} parent=5 // pred_check_branch
        %144 = sbr.rel (%p141) target = $region32
      $region31: #{tpu_custom_call.1} parent=5 // pred_region
        %s145 = ssub.s32 %s12, 1
        %p146 = scmp.lt.s32.totalorder %s17, 1
        %s147 = scalar_select %p146, %s17, 1
        %s148 = smul.addr %s147, 3
        %s149 = smul.addr %s148, 4
        %s150 = scalar_lea.vmem %s0, %s149
        %p151 = pneg %p38
        %p152 = pneg %p35
        %p153 = pneg %p59
        %p154 = pneg %p56
        %p155 = pneg %p80
        %p156 = pneg %p77
        %p157 = pneg %p106
        %p158 = pneg %p103
        %s159 = sand.u32 %s93, 1
        %s160 = scalar_lea.sflag [#allocation3], %s159
        %s161 = sand.u32 %s93, 1
        %s162 = smul.addr %s161, 24
        %s163 = scalar_lea.vmem [#allocation2], %s162
        %p164 = scmp.lt.s32.totalorder %s17, 1
        %s165 = scalar_select %p164, %s17, 1
        %s166 = smul.addr %s165, 3
        %s167 = smul.addr %s166, 4
        %s168 = scalar_lea.vmem %s0, %s167
        %v169 = vld [vmem:[%s168] sm:$0xff]
        %v170 = vld [vmem:[%s168 + $0x8] sm:$0xf]
        %v171 = vld [vmem:[%s1] sm:$0xff]
        %173 = vset.pattern.permute.xlu0 0
        %174 = vperm.xlu0 %173, %v171
        %v175 = vpop.permute.xlu0 %174
        %v179 = vperm.slane %v169, 0
        %v180 = vperm.slane %v169, 4
        %v181 = vperm.slane %v170, 0
        %v185 = vperm.slane %v179, 0
        %v186 = vperm.slane %v180, 0
        %v187 = vperm.slane %v181, 0
        %v188 = vmul.f32 %v175, %v185
        %v189 = vmul.f32 %v175, %v186
        %v190 = vmul.f32 %v175, %v187
        %v191 = vadd.f32 %v188, 0.0
        %v192 = vadd.f32 %v189, 0.0
        %v193 = vadd.f32 %v190, 0.0
        %194 = vset.pattern.permute.xlu0 1
        %195 = vperm.xlu0 %194, %v171
        %v196 = vpop.permute.xlu0 %195
        %v198 = vperm.slane %v169, 1
        %v199 = vperm.slane %v169, 5
        %v200 = vperm.slane %v170, 1
        %v204 = vperm.slane %v198, 1
        %v205 = vperm.slane %v199, 1
        %v206 = vperm.slane %v200, 1
        %v207 = vmul.f32 %v196, %v204
        %v208 = vmul.f32 %v196, %v205
        %v209 = vmul.f32 %v196, %v206
        %v210 = vadd.f32 %v191, %v207
        %v211 = vadd.f32 %v192, %v208
        %v212 = vadd.f32 %v193, %v209
        %213 = vset.pattern.permute.xlu0 2
        %214 = vperm.xlu0 %213, %v171
        %v215 = vpop.permute.xlu0 %214
        %v217 = vperm.slane %v169, 2
        %v218 = vperm.slane %v169, 6
        %v219 = vperm.slane %v170, 2
        %v223 = vperm.slane %v217, 2
        %v224 = vperm.slane %v218, 2
        %v225 = vperm.slane %v219, 2
        %v226 = vmul.f32 %v215, %v223
        %v227 = vmul.f32 %v215, %v224
        %v228 = vmul.f32 %v215, %v225
        %v229 = vadd.f32 %v210, %v226
        %v230 = vadd.f32 %v211, %v227
        %v231 = vadd.f32 %v212, %v228
        %232 = vset.pattern.permute.xlu0 3
        %233 = vperm.xlu0 %232, %v171
        %v234 = vpop.permute.xlu0 %233
        %v236 = vperm.slane %v169, 3
        %v237 = vperm.slane %v169, 7
        %v238 = vperm.slane %v170, 3
        %v242 = vperm.slane %v236, 3
        %v243 = vperm.slane %v237, 3
        %v244 = vperm.slane %v238, 3
        %v245 = vmul.f32 %v234, %v242
        %v246 = vmul.f32 %v234, %v243
        %v247 = vmul.f32 %v234, %v244
        %v248 = vadd.f32 %v229, %v245
        %v249 = vadd.f32 %v230, %v246
        %v250 = vadd.f32 %v231, %v247
        %s251 = scalar_lea.vmem %s1, 8
        %v252 = vld [vmem:[%s251] sm:$0xff]
        %254 = vset.pattern.permute.xlu0 0
        %255 = vperm.xlu0 %254, %v252
        %v256 = vpop.permute.xlu0 %255
        %v258 = vmul.f32 %v256, %v185
        %v259 = vmul.f32 %v256, %v186
        %v260 = vmul.f32 %v256, %v187
        %264 = vrot.lane.b32.xlu0 %v258, 127
        %v265 = vpop.permute.xlu0 %264
        %266 = vrot.lane.b32.xlu0 %v259, 127
        %v267 = vpop.permute.xlu0 %266
        %268 = vrot.lane.b32.xlu0 %v260, 127
        %v269 = vpop.permute.xlu0 %268
        %vm270 = vcmask 1039360
        %v271 = vsel %vm270, %v265, %v267
        %v272 = vsel %vm270, %v267, %v269
        %v276 = vadd.f32 %v248, %v271
        %v277 = vadd.f32 %v249, %v272
        %v278 = vadd.f32 %v250, %v269
        %279 = vset.pattern.permute.xlu0 1
        %280 = vperm.xlu0 %279, %v252
        %v281 = vpop.permute.xlu0 %280
        %v283 = vmul.f32 %v281, %v204
        %v284 = vmul.f32 %v281, %v205
        %v285 = vmul.f32 %v281, %v206
        %289 = vrot.lane.b32.xlu0 %v283, 127
        %v290 = vpop.permute.xlu0 %289
        %291 = vrot.lane.b32.xlu0 %v284, 127
        %v292 = vpop.permute.xlu0 %291
        %293 = vrot.lane.b32.xlu0 %v285, 127
        %v294 = vpop.permute.xlu0 %293
        %v295 = vsel %vm270, %v290, %v292
        %v296 = vsel %vm270, %v292, %v294
        %v300 = vadd.f32 %v276, %v295
        %v301 = vadd.f32 %v277, %v296
        %v302 = vadd.f32 %v278, %v294
        %303 = vset.pattern.permute.xlu0 2
        %304 = vperm.xlu0 %303, %v252
        %v305 = vpop.permute.xlu0 %304
        %v307 = vmul.f32 %v305, %v223
        %v308 = vmul.f32 %v305, %v224
        %v309 = vmul.f32 %v305, %v225
        %313 = vrot.lane.b32.xlu0 %v307, 127
        %v314 = vpop.permute.xlu0 %313
        %315 = vrot.lane.b32.xlu0 %v308, 127
        %v316 = vpop.permute.xlu0 %315
        %317 = vrot.lane.b32.xlu0 %v309, 127
        %v318 = vpop.permute.xlu0 %317
        %v319 = vsel %vm270, %v314, %v316
        %v320 = vsel %vm270, %v316, %v318
        %v324 = vadd.f32 %v300, %v319
        %v325 = vadd.f32 %v301, %v320
        %v326 = vadd.f32 %v302, %v318
        %327 = vset.pattern.permute.xlu0 3
        %328 = vperm.xlu0 %327, %v252
        %v329 = vpop.permute.xlu0 %328
        %v331 = vmul.f32 %v329, %v242
        %v332 = vmul.f32 %v329, %v243
        %v333 = vmul.f32 %v329, %v244
        %337 = vrot.lane.b32.xlu0 %v331, 127
        %v338 = vpop.permute.xlu0 %337
        %339 = vrot.lane.b32.xlu0 %v332, 127
        %v340 = vpop.permute.xlu0 %339
        %341 = vrot.lane.b32.xlu0 %v333, 127
        %v342 = vpop.permute.xlu0 %341
        %v343 = vsel %vm270, %v338, %v340
        %v344 = vsel %vm270, %v340, %v342
        %v348 = vadd.f32 %v324, %v343
        %v349 = vadd.f32 %v325, %v344
        %v350 = vadd.f32 %v326, %v342
        %s351 = scalar_lea.vmem %s1, 16
        %v352 = vld [vmem:[%s351] sm:$0xff]
        %354 = vset.pattern.permute.xlu0 0
        %355 = vperm.xlu0 %354, %v352
        %v356 = vpop.permute.xlu0 %355
        %v358 = vmul.f32 %v356, %v185
        %v359 = vmul.f32 %v356, %v186
        %v360 = vmul.f32 %v356, %v187
        %364 = vrot.lane.b32.xlu0 %v358, 126
        %v365 = vpop.permute.xlu0 %364
        %366 = vrot.lane.b32.xlu0 %v359, 126
        %v367 = vpop.permute.xlu0 %366
        %368 = vrot.lane.b32.xlu0 %v360, 126
        %v369 = vpop.permute.xlu0 %368
        %vm370 = vcmask 1031168
        %v371 = vsel %vm370, %v365, %v367
        %v372 = vsel %vm370, %v367, %v369
        %v376 = vadd.f32 %v348, %v371
        %v377 = vadd.f32 %v349, %v372
        %v378 = vadd.f32 %v350, %v369
        %379 = vset.pattern.permute.xlu0 1
        %380 = vperm.xlu0 %379, %v352
        %v381 = vpop.permute.xlu0 %380
        %v383 = vmul.f32 %v381, %v204
        %v384 = vmul.f32 %v381, %v205
        %v385 = vmul.f32 %v381, %v206
        %389 = vrot.lane.b32.xlu0 %v383, 126
        %v390 = vpop.permute.xlu0 %389
        %391 = vrot.lane.b32.xlu0 %v384, 126
        %v392 = vpop.permute.xlu0 %391
        %393 = vrot.lane.b32.xlu0 %v385, 126
        %v394 = vpop.permute.xlu0 %393
        %v395 = vsel %vm370, %v390, %v392
        %v396 = vsel %vm370, %v392, %v394
        %v400 = vadd.f32 %v376, %v395
        %v401 = vadd.f32 %v377, %v396
        %v402 = vadd.f32 %v378, %v394
        %403 = vset.pattern.permute.xlu0 2
        %404 = vperm.xlu0 %403, %v352
        %v405 = vpop.permute.xlu0 %404
        %v407 = vmul.f32 %v405, %v223
        %v408 = vmul.f32 %v405, %v224
        %v409 = vmul.f32 %v405, %v225
        %413 = vrot.lane.b32.xlu0 %v407, 126
        %v414 = vpop.permute.xlu0 %413
        %415 = vrot.lane.b32.xlu0 %v408, 126
        %v416 = vpop.permute.xlu0 %415
        %417 = vrot.lane.b32.xlu0 %v409, 126
        %v418 = vpop.permute.xlu0 %417
        %v419 = vsel %vm370, %v414, %v416
        %v420 = vsel %vm370, %v416, %v418
        %v424 = vadd.f32 %v400, %v419
        %v425 = vadd.f32 %v401, %v420
        %v426 = vadd.f32 %v402, %v418
        %427 = vset.pattern.permute.xlu0 3
        %428 = vperm.xlu0 %427, %v352
        %v429 = vpop.permute.xlu0 %428
        %v431 = vmul.f32 %v429, %v242
        %v432 = vmul.f32 %v429, %v243
        %v433 = vmul.f32 %v429, %v244
        %437 = vrot.lane.b32.xlu0 %v431, 126
        %v438 = vpop.permute.xlu0 %437
        %439 = vrot.lane.b32.xlu0 %v432, 126
        %v440 = vpop.permute.xlu0 %439
        %441 = vrot.lane.b32.xlu0 %v433, 126
        %v442 = vpop.permute.xlu0 %441
        %v443 = vsel %vm370, %v438, %v440
        %v444 = vsel %vm370, %v440, %v442
        %v448 = vadd.f32 %v424, %v443
        %v449 = vadd.f32 %v425, %v444
        %v450 = vadd.f32 %v426, %v442
        %s451 = scalar_lea.vmem %s1, 24
        %v452 = vld [vmem:[%s451] sm:$0xff]
        %454 = vset.pattern.permute.xlu0 0
        %455 = vperm.xlu0 %454, %v452
        %v456 = vpop.permute.xlu0 %455
        %v458 = vmul.f32 %v456, %v185
        %v459 = vmul.f32 %v456, %v186
        %v460 = vmul.f32 %v456, %v187
        %464 = vrot.lane.b32.xlu0 %v458, 110
        %v465 = vpop.permute.xlu0 %464
        %466 = vrot.lane.b32.xlu0 %v459, 110
        %v467 = vpop.permute.xlu0 %466
        %468 = vrot.lane.b32.xlu0 %v460, 110
        %v469 = vpop.permute.xlu0 %468
        %vm470 = vcmask 900096
        %v471 = vsel %vm470, %v465, %v467
        %v472 = vsel %vm470, %v467, %v469
        %v476 = vadd.f32 %v448, %v471
        %v477 = vadd.f32 %v449, %v472
        %v478 = vadd.f32 %v450, %v469
        %479 = vset.pattern.permute.xlu0 1
        %480 = vperm.xlu0 %479, %v452
        %v481 = vpop.permute.xlu0 %480
        %v483 = vmul.f32 %v481, %v204
        %v484 = vmul.f32 %v481, %v205
        %v485 = vmul.f32 %v481, %v206
        %489 = vrot.lane.b32.xlu0 %v483, 110
        %v490 = vpop.permute.xlu0 %489
        %491 = vrot.lane.b32.xlu0 %v484, 110
        %v492 = vpop.permute.xlu0 %491
        %493 = vrot.lane.b32.xlu0 %v485, 110
        %v494 = vpop.permute.xlu0 %493
        %v495 = vsel %vm470, %v490, %v492
        %v496 = vsel %vm470, %v492, %v494
        %v500 = vadd.f32 %v476, %v495
        %v501 = vadd.f32 %v477, %v496
        %v502 = vadd.f32 %v478, %v494
        %503 = vset.pattern.permute.xlu0 2
        %504 = vperm.xlu0 %503, %v452
        %v505 = vpop.permute.xlu0 %504
        %v507 = vmul.f32 %v505, %v223
        %v508 = vmul.f32 %v505, %v224
        %v509 = vmul.f32 %v505, %v225
        %513 = vrot.lane.b32.xlu0 %v507, 110
        %v514 = vpop.permute.xlu0 %513
        %515 = vrot.lane.b32.xlu0 %v508, 110
        %v516 = vpop.permute.xlu0 %515
        %517 = vrot.lane.b32.xlu0 %v509, 110
        %v518 = vpop.permute.xlu0 %517
        %v519 = vsel %vm470, %v514, %v516
        %v520 = vsel %vm470, %v516, %v518
        %v524 = vadd.f32 %v500, %v519
        %v525 = vadd.f32 %v501, %v520
        %v526 = vadd.f32 %v502, %v518
        %527 = vset.pattern.permute.xlu0 3
        %528 = vperm.xlu0 %527, %v452
        %v529 = vpop.permute.xlu0 %528
        %v531 = vmul.f32 %v529, %v242
        %v532 = vmul.f32 %v529, %v243
        %v533 = vmul.f32 %v529, %v244
        %537 = vrot.lane.b32.xlu0 %v531, 110
        %v538 = vpop.permute.xlu0 %537
        %539 = vrot.lane.b32.xlu0 %v532, 110
        %v540 = vpop.permute.xlu0 %539
        %541 = vrot.lane.b32.xlu0 %v533, 110
        %v542 = vpop.permute.xlu0 %541
        %v543 = vsel %vm470, %v538, %v540
        %v544 = vsel %vm470, %v540, %v542
        %v548 = vadd.f32 %v524, %v543
        %v549 = vadd.f32 %v525, %v544
        %v550 = vadd.f32 %v526, %v542
        %s551 = scalar_lea.vmem %s1, 32
        %v552 = vld [vmem:[%s551] sm:$0xff]
        %554 = vset.pattern.permute.xlu0 0
        %555 = vperm.xlu0 %554, %v552
        %v556 = vpop.permute.xlu0 %555
        %v558 = vmul.f32 %v556, %v185
        %v559 = vmul.f32 %v556, %v186
        %v560 = vmul.f32 %v556, %v187
        %564 = vrot.lane.b32.xlu0 %v558, 109
        %v565 = vpop.permute.xlu0 %564
        %566 = vrot.lane.b32.xlu0 %v559, 109
        %v567 = vpop.permute.xlu0 %566
        %568 = vrot.lane.b32.xlu0 %v560, 109
        %v569 = vpop.permute.xlu0 %568
        %vm570 = vcmask 891904
        %v571 = vsel %vm570, %v565, %v567
        %v572 = vsel %vm570, %v567, %v569
        %v576 = vadd.f32 %v548, %v571
        %v577 = vadd.f32 %v549, %v572
        %v578 = vadd.f32 %v550, %v569
        %579 = vset.pattern.permute.xlu0 1
        %580 = vperm.xlu0 %579, %v552
        %v581 = vpop.permute.xlu0 %580
        %v583 = vmul.f32 %v581, %v204
        %v584 = vmul.f32 %v581, %v205
        %v585 = vmul.f32 %v581, %v206
        %589 = vrot.lane.b32.xlu0 %v583, 109
        %v590 = vpop.permute.xlu0 %589
        %591 = vrot.lane.b32.xlu0 %v584, 109
        %v592 = vpop.permute.xlu0 %591
        %593 = vrot.lane.b32.xlu0 %v585, 109
        %v594 = vpop.permute.xlu0 %593
        %v595 = vsel %vm570, %v590, %v592
        %v596 = vsel %vm570, %v592, %v594
        %v600 = vadd.f32 %v576, %v595
        %v601 = vadd.f32 %v577, %v596
        %v602 = vadd.f32 %v578, %v594
        %603 = vset.pattern.permute.xlu0 2
        %604 = vperm.xlu0 %603, %v552
        %v605 = vpop.permute.xlu0 %604
        %v607 = vmul.f32 %v605, %v223
        %v608 = vmul.f32 %v605, %v224
        %v609 = vmul.f32 %v605, %v225
        %613 = vrot.lane.b32.xlu0 %v607, 109
        %v614 = vpop.permute.xlu0 %613
        %615 = vrot.lane.b32.xlu0 %v608, 109
        %v616 = vpop.permute.xlu0 %615
        %617 = vrot.lane.b32.xlu0 %v609, 109
        %v618 = vpop.permute.xlu0 %617
        %v619 = vsel %vm570, %v614, %v616
        %v620 = vsel %vm570, %v616, %v618
        %v624 = vadd.f32 %v600, %v619
        %v625 = vadd.f32 %v601, %v620
        %v626 = vadd.f32 %v602, %v618
        %627 = vset.pattern.permute.xlu0 3
        %628 = vperm.xlu0 %627, %v552
        %v629 = vpop.permute.xlu0 %628
        %v631 = vmul.f32 %v629, %v242
        %v632 = vmul.f32 %v629, %v243
        %v633 = vmul.f32 %v629, %v244
        %637 = vrot.lane.b32.xlu0 %v631, 109
        %v638 = vpop.permute.xlu0 %637
        %639 = vrot.lane.b32.xlu0 %v632, 109
        %v640 = vpop.permute.xlu0 %639
        %641 = vrot.lane.b32.xlu0 %v633, 109
        %v642 = vpop.permute.xlu0 %641
        %v643 = vsel %vm570, %v638, %v640
        %v644 = vsel %vm570, %v640, %v642
        %v648 = vadd.f32 %v624, %v643
        %v649 = vadd.f32 %v625, %v644
        %v650 = vadd.f32 %v626, %v642
        %s651 = scalar_lea.vmem %s1, 40
        %v652 = vld [vmem:[%s651] sm:$0xff]
        %654 = vset.pattern.permute.xlu0 0
        %655 = vperm.xlu0 %654, %v652
        %v656 = vpop.permute.xlu0 %655
        %v658 = vmul.f32 %v656, %v185
        %v659 = vmul.f32 %v656, %v186
        %v660 = vmul.f32 %v656, %v187
        %664 = vrot.lane.b32.xlu0 %v658, 108
        %v665 = vpop.permute.xlu0 %664
        %666 = vrot.lane.b32.xlu0 %v659, 108
        %v667 = vpop.permute.xlu0 %666
        %668 = vrot.lane.b32.xlu0 %v660, 108
        %v669 = vpop.permute.xlu0 %668
        %vm670 = vcmask 883712
        %v671 = vsel %vm670, %v665, %v667
        %v672 = vsel %vm670, %v667, %v669
        %v676 = vadd.f32 %v648, %v671
        %v677 = vadd.f32 %v649, %v672
        %v678 = vadd.f32 %v650, %v669
        %679 = vset.pattern.permute.xlu0 1
        %680 = vperm.xlu0 %679, %v652
        %v681 = vpop.permute.xlu0 %680
        %v683 = vmul.f32 %v681, %v204
        %v684 = vmul.f32 %v681, %v205
        %v685 = vmul.f32 %v681, %v206
        %689 = vrot.lane.b32.xlu0 %v683, 108
        %v690 = vpop.permute.xlu0 %689
        %691 = vrot.lane.b32.xlu0 %v684, 108
        %v692 = vpop.permute.xlu0 %691
        %693 = vrot.lane.b32.xlu0 %v685, 108
        %v694 = vpop.permute.xlu0 %693
        %v695 = vsel %vm670, %v690, %v692
        %v696 = vsel %vm670, %v692, %v694
        %v700 = vadd.f32 %v676, %v695
        %v701 = vadd.f32 %v677, %v696
        %v702 = vadd.f32 %v678, %v694
        %703 = vset.pattern.permute.xlu0 2
        %704 = vperm.xlu0 %703, %v652
        %v705 = vpop.permute.xlu0 %704
        %v707 = vmul.f32 %v705, %v223
        %v708 = vmul.f32 %v705, %v224
        %v709 = vmul.f32 %v705, %v225
        %713 = vrot.lane.b32.xlu0 %v707, 108
        %v714 = vpop.permute.xlu0 %713
        %715 = vrot.lane.b32.xlu0 %v708, 108
        %v716 = vpop.permute.xlu0 %715
        %717 = vrot.lane.b32.xlu0 %v709, 108
        %v718 = vpop.permute.xlu0 %717
        %v719 = vsel %vm670, %v714, %v716
        %v720 = vsel %vm670, %v716, %v718
        %v724 = vadd.f32 %v700, %v719
        %v725 = vadd.f32 %v701, %v720
        %v726 = vadd.f32 %v702, %v718
        %727 = vset.pattern.permute.xlu0 3
        %728 = vperm.xlu0 %727, %v652
        %v729 = vpop.permute.xlu0 %728
        %v731 = vmul.f32 %v729, %v242
        %v732 = vmul.f32 %v729, %v243
        %v733 = vmul.f32 %v729, %v244
        %737 = vrot.lane.b32.xlu0 %v731, 108
        %v738 = vpop.permute.xlu0 %737
        %739 = vrot.lane.b32.xlu0 %v732, 108
        %v740 = vpop.permute.xlu0 %739
        %741 = vrot.lane.b32.xlu0 %v733, 108
        %v742 = vpop.permute.xlu0 %741
        %v743 = vsel %vm670, %v738, %v740
        %v744 = vsel %vm670, %v740, %v742
        %v748 = vadd.f32 %v724, %v743
        %v749 = vadd.f32 %v725, %v744
        %v750 = vadd.f32 %v726, %v742
        %s751 = scalar_lea.vmem %s1, 48
        %v752 = vld [vmem:[%s751] sm:$0xff]
        %754 = vset.pattern.permute.xlu0 0
        %755 = vperm.xlu0 %754, %v752
        %v756 = vpop.permute.xlu0 %755
        %v758 = vmul.f32 %v756, %v185
        %v759 = vmul.f32 %v756, %v186
        %v760 = vmul.f32 %v756, %v187
        %764 = vrot.lane.b32.xlu0 %v758, 92
        %v765 = vpop.permute.xlu0 %764
        %766 = vrot.lane.b32.xlu0 %v759, 92
        %v767 = vpop.permute.xlu0 %766
        %768 = vrot.lane.b32.xlu0 %v760, 92
        %v769 = vpop.permute.xlu0 %768
        %vm770 = vcmask 752640
        %v771 = vsel %vm770, %v765, %v767
        %v772 = vsel %vm770, %v767, %v769
        %v776 = vadd.f32 %v748, %v771
        %v777 = vadd.f32 %v749, %v772
        %v778 = vadd.f32 %v750, %v769
        %779 = vset.pattern.permute.xlu0 1
        %780 = vperm.xlu0 %779, %v752
        %v781 = vpop.permute.xlu0 %780
        %v783 = vmul.f32 %v781, %v204
        %v784 = vmul.f32 %v781, %v205
        %v785 = vmul.f32 %v781, %v206
        %789 = vrot.lane.b32.xlu0 %v783, 92
        %v790 = vpop.permute.xlu0 %789
        %791 = vrot.lane.b32.xlu0 %v784, 92
        %v792 = vpop.permute.xlu0 %791
        %793 = vrot.lane.b32.xlu0 %v785, 92
        %v794 = vpop.permute.xlu0 %793
        %v795 = vsel %vm770, %v790, %v792
        %v796 = vsel %vm770, %v792, %v794
        %v800 = vadd.f32 %v776, %v795
        %v801 = vadd.f32 %v777, %v796
        %v802 = vadd.f32 %v778, %v794
        %803 = vset.pattern.permute.xlu0 2
        %804 = vperm.xlu0 %803, %v752
        %v805 = vpop.permute.xlu0 %804
        %v807 = vmul.f32 %v805, %v223
        %v808 = vmul.f32 %v805, %v224
        %v809 = vmul.f32 %v805, %v225
        %813 = vrot.lane.b32.xlu0 %v807, 92
        %v814 = vpop.permute.xlu0 %813
        %815 = vrot.lane.b32.xlu0 %v808, 92
        %v816 = vpop.permute.xlu0 %815
        %817 = vrot.lane.b32.xlu0 %v809, 92
        %v818 = vpop.permute.xlu0 %817
        %v819 = vsel %vm770, %v814, %v816
        %v820 = vsel %vm770, %v816, %v818
        %v824 = vadd.f32 %v800, %v819
        %v825 = vadd.f32 %v801, %v820
        %v826 = vadd.f32 %v802, %v818
        %827 = vset.pattern.permute.xlu0 3
        %828 = vperm.xlu0 %827, %v752
        %v829 = vpop.permute.xlu0 %828
        %v831 = vmul.f32 %v829, %v242
        %v832 = vmul.f32 %v829, %v243
        %v833 = vmul.f32 %v829, %v244
        %837 = vrot.lane.b32.xlu0 %v831, 92
        %v838 = vpop.permute.xlu0 %837
        %839 = vrot.lane.b32.xlu0 %v832, 92
        %v840 = vpop.permute.xlu0 %839
        %841 = vrot.lane.b32.xlu0 %v833, 92
        %v842 = vpop.permute.xlu0 %841
        %v843 = vsel %vm770, %v838, %v840
        %v844 = vsel %vm770, %v840, %v842
        %v848 = vadd.f32 %v824, %v843
        %v849 = vadd.f32 %v825, %v844
        %v850 = vadd.f32 %v826, %v842
        %s851 = scalar_lea.vmem %s1, 56
        %v852 = vld [vmem:[%s851] sm:$0xff]
        %854 = vset.pattern.permute.xlu0 0
        %855 = vperm.xlu0 %854, %v852
        %v856 = vpop.permute.xlu0 %855
        %v858 = vmul.f32 %v856, %v185
        %v859 = vmul.f32 %v856, %v186
        %v860 = vmul.f32 %v856, %v187
        %864 = vrot.lane.b32.xlu0 %v858, 91
        %v865 = vpop.permute.xlu0 %864
        %866 = vrot.lane.b32.xlu0 %v859, 91
        %v867 = vpop.permute.xlu0 %866
        %868 = vrot.lane.b32.xlu0 %v860, 91
        %v869 = vpop.permute.xlu0 %868
        %vm870 = vcmask 744448
        %v871 = vsel %vm870, %v865, %v867
        %v872 = vsel %vm870, %v867, %v869
        %v876 = vadd.f32 %v848, %v871
        %v877 = vadd.f32 %v849, %v872
        %v878 = vadd.f32 %v850, %v869
        %879 = vset.pattern.permute.xlu0 1
        %880 = vperm.xlu0 %879, %v852
        %v881 = vpop.permute.xlu0 %880
        %v883 = vmul.f32 %v881, %v204
        %v884 = vmul.f32 %v881, %v205
        %v885 = vmul.f32 %v881, %v206
        %889 = vrot.lane.b32.xlu0 %v883, 91
        %v890 = vpop.permute.xlu0 %889
        %891 = vrot.lane.b32.xlu0 %v884, 91
        %v892 = vpop.permute.xlu0 %891
        %893 = vrot.lane.b32.xlu0 %v885, 91
        %v894 = vpop.permute.xlu0 %893
        %v895 = vsel %vm870, %v890, %v892
        %v896 = vsel %vm870, %v892, %v894
        %v900 = vadd.f32 %v876, %v895
        %v901 = vadd.f32 %v877, %v896
        %v902 = vadd.f32 %v878, %v894
        %903 = vset.pattern.permute.xlu0 2
        %904 = vperm.xlu0 %903, %v852
        %v905 = vpop.permute.xlu0 %904
        %v907 = vmul.f32 %v905, %v223
        %v908 = vmul.f32 %v905, %v224
        %v909 = vmul.f32 %v905, %v225
        %913 = vrot.lane.b32.xlu0 %v907, 91
        %v914 = vpop.permute.xlu0 %913
        %915 = vrot.lane.b32.xlu0 %v908, 91
        %v916 = vpop.permute.xlu0 %915
        %917 = vrot.lane.b32.xlu0 %v909, 91
        %v918 = vpop.permute.xlu0 %917
        %v919 = vsel %vm870, %v914, %v916
        %v920 = vsel %vm870, %v916, %v918
        %v924 = vadd.f32 %v900, %v919
        %v925 = vadd.f32 %v901, %v920
        %v926 = vadd.f32 %v902, %v918
        %927 = vset.pattern.permute.xlu0 3
        %928 = vperm.xlu0 %927, %v852
        %v929 = vpop.permute.xlu0 %928
        %v931 = vmul.f32 %v929, %v242
        %v932 = vmul.f32 %v929, %v243
        %v933 = vmul.f32 %v929, %v244
        %937 = vrot.lane.b32.xlu0 %v931, 91
        %v938 = vpop.permute.xlu0 %937
        %939 = vrot.lane.b32.xlu0 %v932, 91
        %v940 = vpop.permute.xlu0 %939
        %941 = vrot.lane.b32.xlu0 %v933, 91
        %v942 = vpop.permute.xlu0 %941
        %v943 = vsel %vm870, %v938, %v940
        %v944 = vsel %vm870, %v940, %v942
        %v948 = vadd.f32 %v924, %v943
        %v949 = vadd.f32 %v925, %v944
        %v950 = vadd.f32 %v926, %v942
        %s951 = scalar_lea.vmem %s1, 64
        %v952 = vld [vmem:[%s951] sm:$0xff]
        %954 = vset.pattern.permute.xlu0 0
        %955 = vperm.xlu0 %954, %v952
        %v956 = vpop.permute.xlu0 %955
        %v958 = vmul.f32 %v956, %v185
        %v959 = vmul.f32 %v956, %v186
        %v960 = vmul.f32 %v956, %v187
        %964 = vrot.lane.b32.xlu0 %v958, 90
        %v965 = vpop.permute.xlu0 %964
        %966 = vrot.lane.b32.xlu0 %v959, 90
        %v967 = vpop.permute.xlu0 %966
        %968 = vrot.lane.b32.xlu0 %v960, 90
        %v969 = vpop.permute.xlu0 %968
        %vm970 = vcmask 736256
        %v971 = vsel %vm970, %v965, %v967
        %v972 = vsel %vm970, %v967, %v969
        %v976 = vadd.f32 %v948, %v971
        %v977 = vadd.f32 %v949, %v972
        %v978 = vadd.f32 %v950, %v969
        %979 = vset.pattern.permute.xlu0 1
        %980 = vperm.xlu0 %979, %v952
        %v981 = vpop.permute.xlu0 %980
        %v983 = vmul.f32 %v981, %v204
        %v984 = vmul.f32 %v981, %v205
        %v985 = vmul.f32 %v981, %v206
        %989 = vrot.lane.b32.xlu0 %v983, 90
        %v990 = vpop.permute.xlu0 %989
        %991 = vrot.lane.b32.xlu0 %v984, 90
        %v992 = vpop.permute.xlu0 %991
        %993 = vrot.lane.b32.xlu0 %v985, 90
        %v994 = vpop.permute.xlu0 %993
        %v995 = vsel %vm970, %v990, %v992
        %v996 = vsel %vm970, %v992, %v994
        %v1000 = vadd.f32 %v976, %v995
        %v1001 = vadd.f32 %v977, %v996
        %v1002 = vadd.f32 %v978, %v994
        %1003 = vset.pattern.permute.xlu0 2
        %1004 = vperm.xlu0 %1003, %v952
        %v1005 = vpop.permute.xlu0 %1004
        %v1007 = vmul.f32 %v1005, %v223
        %v1008 = vmul.f32 %v1005, %v224
        %v1009 = vmul.f32 %v1005, %v225
        %1013 = vrot.lane.b32.xlu0 %v1007, 90
        %v1014 = vpop.permute.xlu0 %1013
        %1015 = vrot.lane.b32.xlu0 %v1008, 90
        %v1016 = vpop.permute.xlu0 %1015
        %1017 = vrot.lane.b32.xlu0 %v1009, 90
        %v1018 = vpop.permute.xlu0 %1017
        %v1019 = vsel %vm970, %v1014, %v1016
        %v1020 = vsel %vm970, %v1016, %v1018
        %v1024 = vadd.f32 %v1000, %v1019
        %v1025 = vadd.f32 %v1001, %v1020
        %v1026 = vadd.f32 %v1002, %v1018
        %1027 = vset.pattern.permute.xlu0 3
        %1028 = vperm.xlu0 %1027, %v952
        %v1029 = vpop.permute.xlu0 %1028
        %v1031 = vmul.f32 %v1029, %v242
        %v1032 = vmul.f32 %v1029, %v243
        %v1033 = vmul.f32 %v1029, %v244
        %1037 = vrot.lane.b32.xlu0 %v1031, 90
        %v1038 = vpop.permute.xlu0 %1037
        %1039 = vrot.lane.b32.xlu0 %v1032, 90
        %v1040 = vpop.permute.xlu0 %1039
        %1041 = vrot.lane.b32.xlu0 %v1033, 90
        %v1042 = vpop.permute.xlu0 %1041
        %v1043 = vsel %vm970, %v1038, %v1040
        %v1044 = vsel %vm970, %v1040, %v1042
        %v1048 = vadd.f32 %v1024, %v1043
        %v1049 = vadd.f32 %v1025, %v1044
        %v1050 = vadd.f32 %v1026, %v1042
        %v1051 = vld [vmem:[%s2] sm:$0xff]
        %1053 = vset.pattern.permute.xlu0 0
        %1054 = vperm.xlu0 %1053, %v1051
        %v1055 = vpop.permute.xlu0 %1054
        %v1057 = vadd.f32 %v1048, %v1055
        %v1058 = vadd.f32 %v1049, %v1055
        %v1059 = vadd.f32 %v1050, %v1055
        %v1060 = vmax.f32 %v1057, 0.0
        %v1061 = vmax.f32 %v1058, 0.0
        %v1062 = vmax.f32 %v1059, 0.0
        %1063 = vst [vmem:[%s163] sm:$0xff] %v1060
        %1064 = vst [vmem:[%s163 + $0x8] sm:$0xff] %v1061
        %vm1065 = vcmask 261120
        %1066 = vst.msk [vmem:[%s163 + $0x10] sm:$0xff] %vm1065, %v1062
        %s1067 = sand.u32 %s93, 1
        %s1068 = scalar_lea.sflag [#allocation3], %s1067
        %s1069 = sand.u32 %s93, 1
        %s1070 = smul.addr %s1069, 24
        %s1071 = scalar_lea.vmem [#allocation2], %s1070
        // Predicated region
        $region33: #{tpu_custom_call.1} parent=31 // pred_check
          %p1072 = pneg %p103
        $region34: #{tpu_custom_call.1} parent=31 // pred_check_branch
          %1074 = sbr.rel (%p1072) target = $region36
        $region35: #{tpu_custom_call.1} parent=31 // pred_region
          %1076 = vsyncadd %s1068, 0
          %s1077 = smul.addr %s17, 3
          %s1078 = smul.addr %s1077, 8
          %s1079 = scalar_lea.hbm %s3, %s1078
          %s1081 = sshll.u32 %s1071, 4
          %s1082 = int_to_ptr.vmem [resolvable:$true] %s1081
          %s1083 = sshll.u32 %s1079, 4
          %s1084 = int_to_ptr.hbm [resolvable:$true] %s1083
          %1086 = dma.vmem_to_hbm [thread:$0]  %s1082, 384, %s1084, %s1068
        $region36: #{tpu_custom_call.1} parent=31 // pred_fallthru
          _
      $region32: #{tpu_custom_call.1} parent=5 // pred_fallthru
        _
      %p1087 = scmp.le.s32.totalorder 2, %s12
      // Predicated region
      $region37: #{tpu_custom_call.1} parent=5 // pred_check
        %p1088 = pneg %p1087
      $region38: #{tpu_custom_call.1} parent=5 // pred_check_branch
        %1090 = sbr.rel (%p1088) target = $region40
      $region39: #{tpu_custom_call.1} parent=5 // pred_region
        %s1091 = ssub.s32 %s12, 2
        // Predicated region
        $region41: #{tpu_custom_call.1} parent=39 // pred_check
          %p1092 = pneg %p109
        $region42: #{tpu_custom_call.1} parent=39 // pred_check_branch
          %1094 = sbr.rel (%p1092) target = $region44
        $region43: #{tpu_custom_call.1} parent=39 // pred_region
          %s1095 = sand.u32 %s94, 1
          %s1096 = scalar_lea.sflag [#allocation3], %s1095
          %s1097 = sand.u32 %s94, 1
          %s1098 = smul.addr %s1097, 24
          %s1099 = scalar_lea.vmem [#allocation2], %s1098
          %1101 = dma.done %s1096, 384
        $region44: #{tpu_custom_call.1} parent=39 // pred_fallthru
          _
      $region40: #{tpu_custom_call.1} parent=5 // pred_fallthru
        _
    $region6: #{tpu_custom_call.1} parent=1 // loop_footer
      %s16 = sadd.s32 1, %s12
    $region7: #{tpu_custom_call.1} parent=1 // loop_footer_branch
      %11 = sbr.rel target = $region3
    $region8: #{tpu_custom_call.1} parent=1 // loop_exit
      _
    %1102 = vsyncpa [#allocation3], 1
    %s1103 = scalar_lea.sflag [#allocation3], 1
    %1104 = vsyncpa %s1103, 1

</llo_original>
